<compile_context>
chip_gen: v5e
topology: v5e:2x2
jax: 0.10.0
libtpu: 0.0.40
codegen_flags: <defaults>
</compile_context>

<pallas_src>
import functools

import jax
import jax.numpy as jnp
from jax import lax
from jax.experimental import pallas as pl
from jax.experimental.pallas import tpu as pltpu


# ----------------------------- fused kernel -------------------------------- #

def _fused_attention_kernel(x_ref, wqkv_ref, wproj_ref, bproj_ref, o_ref,
                            qkv_sc, ctx_sc, *, scale, num_heads, head_dim,
                            model_dim):
    """Full Attention.forward for one batch element, entirely in VMEM.

    x_ref     : (N, C)    activation block for this batch element
    wqkv_ref  : (C, 3C)   qkv weight (resident across the batch grid)
    wproj_ref : (C, C)    proj weight (resident)
    bproj_ref : (1, C)    proj bias   (resident)
    o_ref     : (N, C)    output block
    qkv_sc    : (N, 3C)   VMEM scratch, columns = [q | k | v]
    ctx_sc    : (N, C)    VMEM scratch, head-merged attention output
    """
    # 1) qkv projection: one wide MXU matmul, stays in VMEM (no HBM round trip).
    qkv_sc[...] = jnp.dot(
        x_ref[...], wqkv_ref[...], preferred_element_type=jnp.float32
    ).astype(qkv_sc.dtype)

    # 2) per-head attention; static column slices of the lane-dense qkv slab,
    #    output written per-head into the head-merged layout the proj consumes.
    for h in range(num_heads):
        lo = h * head_dim
        hi = lo + head_dim
        qh = qkv_sc[:, lo:hi]
        kh = qkv_sc[:, model_dim + lo:model_dim + hi]
        vh = qkv_sc[:, 2 * model_dim + lo:2 * model_dim + hi]

        # Fold the softmax scale into q: N*hd multiplies instead of N*N.
        qh = qh * jnp.asarray(scale, qh.dtype)

        # q @ k^T without materializing a transposed k tile (MXU, f32 acc).
        s = lax.dot_general(
            qh, kh,
            dimension_numbers=(((1,), (1,)), ((), ())),
            preferred_element_type=jnp.float32,
        )
        s = s - jnp.max(s, axis=-1, keepdims=True)
        p = jnp.exp(s)
        # Approx reciprocal uses the EUP slot -> effectively free.
        p = p * pl.reciprocal(jnp.sum(p, axis=-1, keepdims=True), approx=True)

        oh = jnp.dot(p.astype(vh.dtype), vh, preferred_element_type=jnp.float32)
        ctx_sc[:, lo:hi] = oh.astype(ctx_sc.dtype)

    # 3) output projection + bias, written straight to the output block.
    acc = jnp.dot(ctx_sc[...], wproj_ref[...], preferred_element_type=jnp.float32)
    o_ref[...] = (acc + bproj_ref[...].astype(jnp.float32)).astype(o_ref.dtype)


# --------------------------------- wrapper --------------------------------- #

def attention_forward(x, w_qkv, w_proj, b_proj, *, num_heads):
    """Pallas equivalent of Attention.forward(x) with out_attn=False.

    x:      (B, N, C)
    w_qkv:  (C, 3C)   -- pre-transposed qkv weight (qkv_bias=False)
    w_proj: (C, C)    -- pre-transposed proj weight
    b_proj: (1, C)    -- proj bias
    """
    B, N, C = x.shape
    head_dim = C // num_heads
    scale = head_dim ** -0.5
    itemsize = jnp.dtype(x.dtype).itemsize

    cost = pl.CostEstimate(
        flops=2 * B * N * C * (3 * C)          # qkv projection
        + 4 * B * N * N * C                    # QK^T and P@V
        + 2 * B * N * C * C,                   # output projection
        transcendentals=B * num_heads * N * N,  # exp
        bytes_accessed=(B * N * C              # x
                        + C * 3 * C + C * C + C  # weights (read once)
                        + B * N * C) * itemsize,  # out
    )
    kernel = functools.partial(
        _fused_attention_kernel,
        scale=scale,
        num_heads=num_heads,
        head_dim=head_dim,
        model_dim=C,
    )
    # TODO(synk): for very large C (weights not fitting VMEM alongside the
    # double-buffered activation blocks), fall back to separate tiled matmuls.
    return pl.pallas_call(
        kernel,
        out_shape=jax.ShapeDtypeStruct((B, N, C), x.dtype),
        grid=(B,),
        in_specs=[
            # activation block for batch element b
            pl.BlockSpec((None, N, C), lambda b: (b, 0, 0)),
            # weights/bias: constant block index -> fetched once, resident
            pl.BlockSpec((C, 3 * C), lambda b: (0, 0)),
            pl.BlockSpec((C, C), lambda b: (0, 0)),
            pl.BlockSpec((1, C), lambda b: (0, 0)),
        ],
        out_specs=pl.BlockSpec((None, N, C), lambda b: (b, 0, 0)),
        scratch_shapes=[
            pltpu.VMEM((N, 3 * C), x.dtype),   # qkv slab
            pltpu.VMEM((N, C), x.dtype),       # head-merged context
        ],
        compiler_params=pltpu.CompilerParams(
            dimension_semantics=("parallel",),
            vmem_limit_bytes=64 * 1024 * 1024,
        ),
        cost_estimate=cost,
    )(x, w_qkv, w_proj, b_proj)


# ------------------------- pure-JAX reference ------------------------------ #

def attention_reference(x, w_qkv, w_proj, b_proj, *, num_heads):
    B, N, C = x.shape
    H = num_heads
    hd = C // H
    scale = hd ** -0.5
    qkv = (x.reshape(B * N, C) @ w_qkv).reshape(B, N, 3, H, hd)
    qkv = qkv.transpose(2, 0, 3, 1, 4)
    q, k, v = qkv[0], qkv[1], qkv[2]
    attn = (q @ jnp.swapaxes(k, -2, -1)) * scale
    attn = jax.nn.softmax(attn, axis=-1)
    out = (attn @ v).transpose(0, 2, 1, 3).reshape(B * N, C)
    return (out @ w_proj + b_proj).reshape(B, N, C)


# ---------------------------------- main ----------------------------------- #

if __name__ == "__main__":
    B, N, C = 2, 8, 32
    num_heads = 8

    key = jax.random.PRNGKey(0)
    k_x, k_qkv, k_proj, k_bias = jax.random.split(key, 4)

    x = jax.random.normal(k_x, (B, N, C), dtype=jnp.float32)
    # Deterministic parameter init (nn.Linear-like small normal weights).
    w_qkv = 0.02 * jax.random.normal(k_qkv, (C, 3 * C), dtype=jnp.float32)
    w_proj = 0.02 * jax.random.normal(k_proj, (C, C), dtype=jnp.float32)
    b_proj = 0.02 * jax.random.normal(k_bias, (1, C), dtype=jnp.float32)

    out = attention_forward(x, w_qkv, w_proj, b_proj, num_heads=num_heads)
    out = jax.block_until_ready(out)

    ref = attention_reference(x, w_qkv, w_proj, b_proj, num_heads=num_heads)
    assert out.shape == (B, N, C)
    # Tolerance accounts for the EUP approximate reciprocal in the softmax
    # denominator (relative error ~1e-4); observed error is far smaller.
    assert jnp.allclose(out, ref, atol=1e-3, rtol=1e-3), "mismatch vs reference"

    print("KERNEL_OK")
</pallas_src>

<mosaic_0001>
module attributes {stable_mosaic.version = 11 : i64} {
  func.func @_fused_attention_kernel(%arg0: i32, %arg1: memref<1x8x32xf32, #tpu.memory_space<vmem>>, %arg2: memref<32x96xf32, #tpu.memory_space<vmem>>, %arg3: memref<32x32xf32, #tpu.memory_space<vmem>>, %arg4: memref<1x32xf32, #tpu.memory_space<vmem>>, %arg5: memref<1x8x32xf32, #tpu.memory_space<vmem>>, %arg6: memref<8x96xf32, #tpu.memory_space<vmem>>, %arg7: memref<8x32xf32, #tpu.memory_space<vmem>>) attributes {dimension_semantics = [#tpu.dimension_semantics<parallel>], iteration_bounds = array<i64: 2>, scalar_prefetch = 0 : i64, scratch_operands = 2 : i64, tpu.core_type = #tpu.core_type<tc>, window_params = [{transform_indices = @transform_0, window_bounds = array<i64: 1, 8, 32>}, {pipeline_mode = #tpu.pipeline_mode<synchronous>, transform_indices = @transform_1, window_bounds = array<i64: 32, 96>}, {pipeline_mode = #tpu.pipeline_mode<synchronous>, transform_indices = @transform_2, window_bounds = array<i64: 32, 32>}, {pipeline_mode = #tpu.pipeline_mode<synchronous>, transform_indices = @transform_3, window_bounds = array<i64: 1, 32>}, {transform_indices = @transform_4, window_bounds = array<i64: 1, 8, 32>}]} {
    %c0 = arith.constant 0 : index
    %c0_0 = arith.constant 0 : index
    %c0_1 = arith.constant 0 : index
    %0 = vector.load %arg1[%c0, %c0_0, %c0_1] : memref<1x8x32xf32, #tpu.memory_space<vmem>>, vector<1x8x32xf32>
    %1 = vector.shape_cast %0 : vector<1x8x32xf32> to vector<8x32xf32>
    %c0_2 = arith.constant 0 : index
    %c0_3 = arith.constant 0 : index
    %2 = vector.load %arg2[%c0_2, %c0_3] : memref<32x96xf32, #tpu.memory_space<vmem>>, vector<32x96xf32>
    %cst = arith.constant dense<0.000000e+00> : vector<8x96xf32>
    %3 = tpu.matmul %1, %2, %cst {dimension_numbers = #tpu.dot_dimension_numbers<[1], [0], [0], [1], [0, 0, 1, 1], [], []>} : vector<8x32xf32>, vector<32x96xf32>, vector<8x96xf32> -> vector<8x96xf32>
    %c0_4 = arith.constant 0 : index
    %c0_5 = arith.constant 0 : index
    %4 = vector.load %arg6[%c0_4, %c0_5] : memref<8x96xf32, #tpu.memory_space<vmem>>, vector<8x96xf32>
    tpu.vector_store %arg6[%c0_4, %c0_5], %3 {strides = array<i32>} : memref<8x96xf32, #tpu.memory_space<vmem>>, vector<8x96xf32>,
    %c0_6 = arith.constant 0 : index
    %c0_7 = arith.constant 0 : index
    %5 = vector.load %arg6[%c0_6, %c0_7] : memref<8x96xf32, #tpu.memory_space<vmem>>, vector<8x4xf32>
    %c0_8 = arith.constant 0 : index
    %c32 = arith.constant 32 : index
    %6 = vector.load %arg6[%c0_8, %c32] : memref<8x96xf32, #tpu.memory_space<vmem>>, vector<8x4xf32>
    %c0_9 = arith.constant 0 : index
    %c64 = arith.constant 64 : index
    %7 = vector.load %arg6[%c0_9, %c64] : memref<8x96xf32, #tpu.memory_space<vmem>>, vector<8x4xf32>
    %cst_10 = arith.constant 5.000000e-01 : f32
    %8 = vector.broadcast %cst_10 : f32 to vector<8x4xf32>
    %9 = arith.mulf %5, %8 : vector<8x4xf32>
    %cst_11 = arith.constant dense<0.000000e+00> : vector<8x8xf32>
    %10 = tpu.matmul %9, %6, %cst_11 {dimension_numbers = #tpu.dot_dimension_numbers<[1], [1], [0], [0], [0, 0, 1, 0], [], []>} : vector<8x4xf32>, vector<8x4xf32>, vector<8x8xf32> -> vector<8x8xf32>
    %cst_12 = arith.constant dense<0xFF800000> : vector<8xf32>
    %11 = vector.multi_reduction <maximumf>, %10, %cst_12 [1] : vector<8x8xf32> to vector<8xf32>
    %12 = vector.shape_cast %11 : vector<8xf32> to vector<8x1xf32>
    %13 = vector.broadcast %12 : vector<8x1xf32> to vector<8x8xf32>
    %14 = arith.subf %10, %13 : vector<8x8xf32>
    %15 = math.exp %14 : vector<8x8xf32>
    %cst_13 = arith.constant dense<0.000000e+00> : vector<8xf32>
    %16 = vector.multi_reduction <add>, %15, %cst_13 [1] : vector<8x8xf32> to vector<8xf32>
    %17 = vector.shape_cast %16 : vector<8xf32> to vector<8x1xf32>
    %18 = tpu.reciprocal %17 {approx = true} : vector<8x1xf32> -> vector<8x1xf32>
    %19 = vector.broadcast %18 : vector<8x1xf32> to vector<8x8xf32>
    %20 = arith.mulf %15, %19 : vector<8x8xf32>
    %cst_14 = arith.constant dense<0.000000e+00> : vector<8x4xf32>
    %21 = tpu.matmul %20, %7, %cst_14 {dimension_numbers = #tpu.dot_dimension_numbers<[1], [0], [0], [1], [0, 0, 1, 1], [], []>} : vector<8x8xf32>, vector<8x4xf32>, vector<8x4xf32> -> vector<8x4xf32>
    %c0_15 = arith.constant 0 : index
    %c0_16 = arith.constant 0 : index
    %22 = vector.load %arg7[%c0_15, %c0_16] : memref<8x32xf32, #tpu.memory_space<vmem>>, vector<8x4xf32>
    tpu.vector_store %arg7[%c0_15, %c0_16], %21 {strides = array<i32>} : memref<8x32xf32, #tpu.memory_space<vmem>>, vector<8x4xf32>,
    %c0_17 = arith.constant 0 : index
    %c4 = arith.constant 4 : index
    %23 = vector.load %arg6[%c0_17, %c4] : memref<8x96xf32, #tpu.memory_space<vmem>>, vector<8x4xf32>
    %c0_18 = arith.constant 0 : index
    %c36 = arith.constant 36 : index
    %24 = vector.load %arg6[%c0_18, %c36] : memref<8x96xf32, #tpu.memory_space<vmem>>, vector<8x4xf32>
    %c0_19 = arith.constant 0 : index
    %c68 = arith.constant 68 : index
    %25 = vector.load %arg6[%c0_19, %c68] : memref<8x96xf32, #tpu.memory_space<vmem>>, vector<8x4xf32>
    %cst_20 = arith.constant 5.000000e-01 : f32
    %26 = vector.broadcast %cst_20 : f32 to vector<8x4xf32>
    %27 = arith.mulf %23, %26 : vector<8x4xf32>
    %cst_21 = arith.constant dense<0.000000e+00> : vector<8x8xf32>
    %28 = tpu.matmul %27, %24, %cst_21 {dimension_numbers = #tpu.dot_dimension_numbers<[1], [1], [0], [0], [0, 0, 1, 0], [], []>} : vector<8x4xf32>, vector<8x4xf32>, vector<8x8xf32> -> vector<8x8xf32>
    %cst_22 = arith.constant dense<0xFF800000> : vector<8xf32>
    %29 = vector.multi_reduction <maximumf>, %28, %cst_22 [1] : vector<8x8xf32> to vector<8xf32>
    %30 = vector.shape_cast %29 : vector<8xf32> to vector<8x1xf32>
    %31 = vector.broadcast %30 : vector<8x1xf32> to vector<8x8xf32>
    %32 = arith.subf %28, %31 : vector<8x8xf32>
    %33 = math.exp %32 : vector<8x8xf32>
    %cst_23 = arith.constant dense<0.000000e+00> : vector<8xf32>
    %34 = vector.multi_reduction <add>, %33, %cst_23 [1] : vector<8x8xf32> to vector<8xf32>
    %35 = vector.shape_cast %34 : vector<8xf32> to vector<8x1xf32>
    %36 = tpu.reciprocal %35 {approx = true} : vector<8x1xf32> -> vector<8x1xf32>
    %37 = vector.broadcast %36 : vector<8x1xf32> to vector<8x8xf32>
    %38 = arith.mulf %33, %37 : vector<8x8xf32>
    %cst_24 = arith.constant dense<0.000000e+00> : vector<8x4xf32>
    %39 = tpu.matmul %38, %25, %cst_24 {dimension_numbers = #tpu.dot_dimension_numbers<[1], [0], [0], [1], [0, 0, 1, 1], [], []>} : vector<8x8xf32>, vector<8x4xf32>, vector<8x4xf32> -> vector<8x4xf32>
    %c0_25 = arith.constant 0 : index
    %c4_26 = arith.constant 4 : index
    %40 = vector.load %arg7[%c0_25, %c4_26] : memref<8x32xf32, #tpu.memory_space<vmem>>, vector<8x4xf32>
    tpu.vector_store %arg7[%c0_25, %c4_26], %39 {strides = array<i32>} : memref<8x32xf32, #tpu.memory_space<vmem>>, vector<8x4xf32>,
    %c0_27 = arith.constant 0 : index
    %c8 = arith.constant 8 : index
    %41 = vector.load %arg6[%c0_27, %c8] : memref<8x96xf32, #tpu.memory_space<vmem>>, vector<8x4xf32>
    %c0_28 = arith.constant 0 : index
    %c40 = arith.constant 40 : index
    %42 = vector.load %arg6[%c0_28, %c40] : memref<8x96xf32, #tpu.memory_space<vmem>>, vector<8x4xf32>
    %c0_29 = arith.constant 0 : index
    %c72 = arith.constant 72 : index
    %43 = vector.load %arg6[%c0_29, %c72] : memref<8x96xf32, #tpu.memory_space<vmem>>, vector<8x4xf32>
    %cst_30 = arith.constant 5.000000e-01 : f32
    %44 = vector.broadcast %cst_30 : f32 to vector<8x4xf32>
    %45 = arith.mulf %41, %44 : vector<8x4xf32>
    %cst_31 = arith.constant dense<0.000000e+00> : vector<8x8xf32>
    %46 = tpu.matmul %45, %42, %cst_31 {dimension_numbers = #tpu.dot_dimension_numbers<[1], [1], [0], [0], [0, 0, 1, 0], [], []>} : vector<8x4xf32>, vector<8x4xf32>, vector<8x8xf32> -> vector<8x8xf32>
    %cst_32 = arith.constant dense<0xFF800000> : vector<8xf32>
    %47 = vector.multi_reduction <maximumf>, %46, %cst_32 [1] : vector<8x8xf32> to vector<8xf32>
    %48 = vector.shape_cast %47 : vector<8xf32> to vector<8x1xf32>
    %49 = vector.broadcast %48 : vector<8x1xf32> to vector<8x8xf32>
    %50 = arith.subf %46, %49 : vector<8x8xf32>
    %51 = math.exp %50 : vector<8x8xf32>
    %cst_33 = arith.constant dense<0.000000e+00> : vector<8xf32>
    %52 = vector.multi_reduction <add>, %51, %cst_33 [1] : vector<8x8xf32> to vector<8xf32>
    %53 = vector.shape_cast %52 : vector<8xf32> to vector<8x1xf32>
    %54 = tpu.reciprocal %53 {approx = true} : vector<8x1xf32> -> vector<8x1xf32>
    %55 = vector.broadcast %54 : vector<8x1xf32> to vector<8x8xf32>
    %56 = arith.mulf %51, %55 : vector<8x8xf32>
    %cst_34 = arith.constant dense<0.000000e+00> : vector<8x4xf32>
    %57 = tpu.matmul %56, %43, %cst_34 {dimension_numbers = #tpu.dot_dimension_numbers<[1], [0], [0], [1], [0, 0, 1, 1], [], []>} : vector<8x8xf32>, vector<8x4xf32>, vector<8x4xf32> -> vector<8x4xf32>
    %c0_35 = arith.constant 0 : index
    %c8_36 = arith.constant 8 : index
    %58 = vector.load %arg7[%c0_35, %c8_36] : memref<8x32xf32, #tpu.memory_space<vmem>>, vector<8x4xf32>
    tpu.vector_store %arg7[%c0_35, %c8_36], %57 {strides = array<i32>} : memref<8x32xf32, #tpu.memory_space<vmem>>, vector<8x4xf32>,
    %c0_37 = arith.constant 0 : index
    %c12 = arith.constant 12 : index
    %59 = vector.load %arg6[%c0_37, %c12] : memref<8x96xf32, #tpu.memory_space<vmem>>, vector<8x4xf32>
    %c0_38 = arith.constant 0 : index
    %c44 = arith.constant 44 : index
    %60 = vector.load %arg6[%c0_38, %c44] : memref<8x96xf32, #tpu.memory_space<vmem>>, vector<8x4xf32>
    %c0_39 = arith.constant 0 : index
    %c76 = arith.constant 76 : index
    %61 = vector.load %arg6[%c0_39, %c76] : memref<8x96xf32, #tpu.memory_space<vmem>>, vector<8x4xf32>
    %cst_40 = arith.constant 5.000000e-01 : f32
    %62 = vector.broadcast %cst_40 : f32 to vector<8x4xf32>
    %63 = arith.mulf %59, %62 : vector<8x4xf32>
    %cst_41 = arith.constant dense<0.000000e+00> : vector<8x8xf32>
    %64 = tpu.matmul %63, %60, %cst_41 {dimension_numbers = #tpu.dot_dimension_numbers<[1], [1], [0], [0], [0, 0, 1, 0], [], []>} : vector<8x4xf32>, vector<8x4xf32>, vector<8x8xf32> -> vector<8x8xf32>
    %cst_42 = arith.constant dense<0xFF800000> : vector<8xf32>
    %65 = vector.multi_reduction <maximumf>, %64, %cst_42 [1] : vector<8x8xf32> to vector<8xf32>
    %66 = vector.shape_cast %65 : vector<8xf32> to vector<8x1xf32>
    %67 = vector.broadcast %66 : vector<8x1xf32> to vector<8x8xf32>
    %68 = arith.subf %64, %67 : vector<8x8xf32>
    %69 = math.exp %68 : vector<8x8xf32>
    %cst_43 = arith.constant dense<0.000000e+00> : vector<8xf32>
    %70 = vector.multi_reduction <add>, %69, %cst_43 [1] : vector<8x8xf32> to vector<8xf32>
    %71 = vector.shape_cast %70 : vector<8xf32> to vector<8x1xf32>
    %72 = tpu.reciprocal %71 {approx = true} : vector<8x1xf32> -> vector<8x1xf32>
    %73 = vector.broadcast %72 : vector<8x1xf32> to vector<8x8xf32>
    %74 = arith.mulf %69, %73 : vector<8x8xf32>
    %cst_44 = arith.constant dense<0.000000e+00> : vector<8x4xf32>
    %75 = tpu.matmul %74, %61, %cst_44 {dimension_numbers = #tpu.dot_dimension_numbers<[1], [0], [0], [1], [0, 0, 1, 1], [], []>} : vector<8x8xf32>, vector<8x4xf32>, vector<8x4xf32> -> vector<8x4xf32>
    %c0_45 = arith.constant 0 : index
    %c12_46 = arith.constant 12 : index
    %76 = vector.load %arg7[%c0_45, %c12_46] : memref<8x32xf32, #tpu.memory_space<vmem>>, vector<8x4xf32>
    tpu.vector_store %arg7[%c0_45, %c12_46], %75 {strides = array<i32>} : memref<8x32xf32, #tpu.memory_space<vmem>>, vector<8x4xf32>,
    %c0_47 = arith.constant 0 : index
    %c16 = arith.constant 16 : index
    %77 = vector.load %arg6[%c0_47, %c16] : memref<8x96xf32, #tpu.memory_space<vmem>>, vector<8x4xf32>
    %c0_48 = arith.constant 0 : index
    %c48 = arith.constant 48 : index
    %78 = vector.load %arg6[%c0_48, %c48] : memref<8x96xf32, #tpu.memory_space<vmem>>, vector<8x4xf32>
    %c0_49 = arith.constant 0 : index
    %c80 = arith.constant 80 : index
    %79 = vector.load %arg6[%c0_49, %c80] : memref<8x96xf32, #tpu.memory_space<vmem>>, vector<8x4xf32>
    %cst_50 = arith.constant 5.000000e-01 : f32
    %80 = vector.broadcast %cst_50 : f32 to vector<8x4xf32>
    %81 = arith.mulf %77, %80 : vector<8x4xf32>
    %cst_51 = arith.constant dense<0.000000e+00> : vector<8x8xf32>
    %82 = tpu.matmul %81, %78, %cst_51 {dimension_numbers = #tpu.dot_dimension_numbers<[1], [1], [0], [0], [0, 0, 1, 0], [], []>} : vector<8x4xf32>, vector<8x4xf32>, vector<8x8xf32> -> vector<8x8xf32>
    %cst_52 = arith.constant dense<0xFF800000> : vector<8xf32>
    %83 = vector.multi_reduction <maximumf>, %82, %cst_52 [1] : vector<8x8xf32> to vector<8xf32>
    %84 = vector.shape_cast %83 : vector<8xf32> to vector<8x1xf32>
    %85 = vector.broadcast %84 : vector<8x1xf32> to vector<8x8xf32>
    %86 = arith.subf %82, %85 : vector<8x8xf32>
    %87 = math.exp %86 : vector<8x8xf32>
    %cst_53 = arith.constant dense<0.000000e+00> : vector<8xf32>
    %88 = vector.multi_reduction <add>, %87, %cst_53 [1] : vector<8x8xf32> to vector<8xf32>
    %89 = vector.shape_cast %88 : vector<8xf32> to vector<8x1xf32>
    %90 = tpu.reciprocal %89 {approx = true} : vector<8x1xf32> -> vector<8x1xf32>
    %91 = vector.broadcast %90 : vector<8x1xf32> to vector<8x8xf32>
    %92 = arith.mulf %87, %91 : vector<8x8xf32>
    %cst_54 = arith.constant dense<0.000000e+00> : vector<8x4xf32>
    %93 = tpu.matmul %92, %79, %cst_54 {dimension_numbers = #tpu.dot_dimension_numbers<[1], [0], [0], [1], [0, 0, 1, 1], [], []>} : vector<8x8xf32>, vector<8x4xf32>, vector<8x4xf32> -> vector<8x4xf32>
    %c0_55 = arith.constant 0 : index
    %c16_56 = arith.constant 16 : index
    %94 = vector.load %arg7[%c0_55, %c16_56] : memref<8x32xf32, #tpu.memory_space<vmem>>, vector<8x4xf32>
    tpu.vector_store %arg7[%c0_55, %c16_56], %93 {strides = array<i32>} : memref<8x32xf32, #tpu.memory_space<vmem>>, vector<8x4xf32>,
    %c0_57 = arith.constant 0 : index
    %c20 = arith.constant 20 : index
    %95 = vector.load %arg6[%c0_57, %c20] : memref<8x96xf32, #tpu.memory_space<vmem>>, vector<8x4xf32>
    %c0_58 = arith.constant 0 : index
    %c52 = arith.constant 52 : index
    %96 = vector.load %arg6[%c0_58, %c52] : memref<8x96xf32, #tpu.memory_space<vmem>>, vector<8x4xf32>
    %c0_59 = arith.constant 0 : index
    %c84 = arith.constant 84 : index
    %97 = vector.load %arg6[%c0_59, %c84] : memref<8x96xf32, #tpu.memory_space<vmem>>, vector<8x4xf32>
    %cst_60 = arith.constant 5.000000e-01 : f32
    %98 = vector.broadcast %cst_60 : f32 to vector<8x4xf32>
    %99 = arith.mulf %95, %98 : vector<8x4xf32>
    %cst_61 = arith.constant dense<0.000000e+00> : vector<8x8xf32>
    %100 = tpu.matmul %99, %96, %cst_61 {dimension_numbers = #tpu.dot_dimension_numbers<[1], [1], [0], [0], [0, 0, 1, 0], [], []>} : vector<8x4xf32>, vector<8x4xf32>, vector<8x8xf32> -> vector<8x8xf32>
    %cst_62 = arith.constant dense<0xFF800000> : vector<8xf32>
    %101 = vector.multi_reduction <maximumf>, %100, %cst_62 [1] : vector<8x8xf32> to vector<8xf32>
    %102 = vector.shape_cast %101 : vector<8xf32> to vector<8x1xf32>
    %103 = vector.broadcast %102 : vector<8x1xf32> to vector<8x8xf32>
    %104 = arith.subf %100, %103 : vector<8x8xf32>
    %105 = math.exp %104 : vector<8x8xf32>
    %cst_63 = arith.constant dense<0.000000e+00> : vector<8xf32>
    %106 = vector.multi_reduction <add>, %105, %cst_63 [1] : vector<8x8xf32> to vector<8xf32>
    %107 = vector.shape_cast %106 : vector<8xf32> to vector<8x1xf32>
    %108 = tpu.reciprocal %107 {approx = true} : vector<8x1xf32> -> vector<8x1xf32>
    %109 = vector.broadcast %108 : vector<8x1xf32> to vector<8x8xf32>
    %110 = arith.mulf %105, %109 : vector<8x8xf32>
    %cst_64 = arith.constant dense<0.000000e+00> : vector<8x4xf32>
    %111 = tpu.matmul %110, %97, %cst_64 {dimension_numbers = #tpu.dot_dimension_numbers<[1], [0], [0], [1], [0, 0, 1, 1], [], []>} : vector<8x8xf32>, vector<8x4xf32>, vector<8x4xf32> -> vector<8x4xf32>
    %c0_65 = arith.constant 0 : index
    %c20_66 = arith.constant 20 : index
    %112 = vector.load %arg7[%c0_65, %c20_66] : memref<8x32xf32, #tpu.memory_space<vmem>>, vector<8x4xf32>
    tpu.vector_store %arg7[%c0_65, %c20_66], %111 {strides = array<i32>} : memref<8x32xf32, #tpu.memory_space<vmem>>, vector<8x4xf32>,
    %c0_67 = arith.constant 0 : index
    %c24 = arith.constant 24 : index
    %113 = vector.load %arg6[%c0_67, %c24] : memref<8x96xf32, #tpu.memory_space<vmem>>, vector<8x4xf32>
    %c0_68 = arith.constant 0 : index
    %c56 = arith.constant 56 : index
    %114 = vector.load %arg6[%c0_68, %c56] : memref<8x96xf32, #tpu.memory_space<vmem>>, vector<8x4xf32>
    %c0_69 = arith.constant 0 : index
    %c88 = arith.constant 88 : index
    %115 = vector.load %arg6[%c0_69, %c88] : memref<8x96xf32, #tpu.memory_space<vmem>>, vector<8x4xf32>
    %cst_70 = arith.constant 5.000000e-01 : f32
    %116 = vector.broadcast %cst_70 : f32 to vector<8x4xf32>
    %117 = arith.mulf %113, %116 : vector<8x4xf32>
    %cst_71 = arith.constant dense<0.000000e+00> : vector<8x8xf32>
    %118 = tpu.matmul %117, %114, %cst_71 {dimension_numbers = #tpu.dot_dimension_numbers<[1], [1], [0], [0], [0, 0, 1, 0], [], []>} : vector<8x4xf32>, vector<8x4xf32>, vector<8x8xf32> -> vector<8x8xf32>
    %cst_72 = arith.constant dense<0xFF800000> : vector<8xf32>
    %119 = vector.multi_reduction <maximumf>, %118, %cst_72 [1] : vector<8x8xf32> to vector<8xf32>
    %120 = vector.shape_cast %119 : vector<8xf32> to vector<8x1xf32>
    %121 = vector.broadcast %120 : vector<8x1xf32> to vector<8x8xf32>
    %122 = arith.subf %118, %121 : vector<8x8xf32>
    %123 = math.exp %122 : vector<8x8xf32>
    %cst_73 = arith.constant dense<0.000000e+00> : vector<8xf32>
    %124 = vector.multi_reduction <add>, %123, %cst_73 [1] : vector<8x8xf32> to vector<8xf32>
    %125 = vector.shape_cast %124 : vector<8xf32> to vector<8x1xf32>
    %126 = tpu.reciprocal %125 {approx = true} : vector<8x1xf32> -> vector<8x1xf32>
    %127 = vector.broadcast %126 : vector<8x1xf32> to vector<8x8xf32>
    %128 = arith.mulf %123, %127 : vector<8x8xf32>
    %cst_74 = arith.constant dense<0.000000e+00> : vector<8x4xf32>
    %129 = tpu.matmul %128, %115, %cst_74 {dimension_numbers = #tpu.dot_dimension_numbers<[1], [0], [0], [1], [0, 0, 1, 1], [], []>} : vector<8x8xf32>, vector<8x4xf32>, vector<8x4xf32> -> vector<8x4xf32>
    %c0_75 = arith.constant 0 : index
    %c24_76 = arith.constant 24 : index
    %130 = vector.load %arg7[%c0_75, %c24_76] : memref<8x32xf32, #tpu.memory_space<vmem>>, vector<8x4xf32>
    tpu.vector_store %arg7[%c0_75, %c24_76], %129 {strides = array<i32>} : memref<8x32xf32, #tpu.memory_space<vmem>>, vector<8x4xf32>,
    %c0_77 = arith.constant 0 : index
    %c28 = arith.constant 28 : index
    %131 = vector.load %arg6[%c0_77, %c28] : memref<8x96xf32, #tpu.memory_space<vmem>>, vector<8x4xf32>
    %c0_78 = arith.constant 0 : index
    %c60 = arith.constant 60 : index
    %132 = vector.load %arg6[%c0_78, %c60] : memref<8x96xf32, #tpu.memory_space<vmem>>, vector<8x4xf32>
    %c0_79 = arith.constant 0 : index
    %c92 = arith.constant 92 : index
    %133 = vector.load %arg6[%c0_79, %c92] : memref<8x96xf32, #tpu.memory_space<vmem>>, vector<8x4xf32>
    %cst_80 = arith.constant 5.000000e-01 : f32
    %134 = vector.broadcast %cst_80 : f32 to vector<8x4xf32>
    %135 = arith.mulf %131, %134 : vector<8x4xf32>
    %cst_81 = arith.constant dense<0.000000e+00> : vector<8x8xf32>
    %136 = tpu.matmul %135, %132, %cst_81 {dimension_numbers = #tpu.dot_dimension_numbers<[1], [1], [0], [0], [0, 0, 1, 0], [], []>} : vector<8x4xf32>, vector<8x4xf32>, vector<8x8xf32> -> vector<8x8xf32>
    %cst_82 = arith.constant dense<0xFF800000> : vector<8xf32>
    %137 = vector.multi_reduction <maximumf>, %136, %cst_82 [1] : vector<8x8xf32> to vector<8xf32>
    %138 = vector.shape_cast %137 : vector<8xf32> to vector<8x1xf32>
    %139 = vector.broadcast %138 : vector<8x1xf32> to vector<8x8xf32>
    %140 = arith.subf %136, %139 : vector<8x8xf32>
    %141 = math.exp %140 : vector<8x8xf32>
    %cst_83 = arith.constant dense<0.000000e+00> : vector<8xf32>
    %142 = vector.multi_reduction <add>, %141, %cst_83 [1] : vector<8x8xf32> to vector<8xf32>
    %143 = vector.shape_cast %142 : vector<8xf32> to vector<8x1xf32>
    %144 = tpu.reciprocal %143 {approx = true} : vector<8x1xf32> -> vector<8x1xf32>
    %145 = vector.broadcast %144 : vector<8x1xf32> to vector<8x8xf32>
    %146 = arith.mulf %141, %145 : vector<8x8xf32>
    %cst_84 = arith.constant dense<0.000000e+00> : vector<8x4xf32>
    %147 = tpu.matmul %146, %133, %cst_84 {dimension_numbers = #tpu.dot_dimension_numbers<[1], [0], [0], [1], [0, 0, 1, 1], [], []>} : vector<8x8xf32>, vector<8x4xf32>, vector<8x4xf32> -> vector<8x4xf32>
    %c0_85 = arith.constant 0 : index
    %c28_86 = arith.constant 28 : index
    %148 = vector.load %arg7[%c0_85, %c28_86] : memref<8x32xf32, #tpu.memory_space<vmem>>, vector<8x4xf32>
    tpu.vector_store %arg7[%c0_85, %c28_86], %147 {strides = array<i32>} : memref<8x32xf32, #tpu.memory_space<vmem>>, vector<8x4xf32>,
    %c0_87 = arith.constant 0 : index
    %c0_88 = arith.constant 0 : index
    %149 = vector.load %arg7[%c0_87, %c0_88] : memref<8x32xf32, #tpu.memory_space<vmem>>, vector<8x32xf32>
    %c0_89 = arith.constant 0 : index
    %c0_90 = arith.constant 0 : index
    %150 = vector.load %arg3[%c0_89, %c0_90] : memref<32x32xf32, #tpu.memory_space<vmem>>, vector<32x32xf32>
    %cst_91 = arith.constant dense<0.000000e+00> : vector<8x32xf32>
    %151 = tpu.matmul %149, %150, %cst_91 {dimension_numbers = #tpu.dot_dimension_numbers<[1], [0], [0], [1], [0, 0, 1, 1], [], []>} : vector<8x32xf32>, vector<32x32xf32>, vector<8x32xf32> -> vector<8x32xf32>
    %c0_92 = arith.constant 0 : index
    %c0_93 = arith.constant 0 : index
    %152 = vector.load %arg4[%c0_92, %c0_93] : memref<1x32xf32, #tpu.memory_space<vmem>>, vector<1x32xf32>
    %153 = vector.broadcast %152 : vector<1x32xf32> to vector<8x32xf32>
    %154 = arith.addf %151, %153 : vector<8x32xf32>
    %c0_94 = arith.constant 0 : index
    %c0_95 = arith.constant 0 : index
    %c0_96 = arith.constant 0 : index
    %155 = vector.load %arg5[%c0_94, %c0_95, %c0_96] : memref<1x8x32xf32, #tpu.memory_space<vmem>>, vector<1x8x32xf32>
    %156 = vector.shape_cast %155 : vector<1x8x32xf32> to vector<8x32xf32>
    %157 = vector.shape_cast %154 : vector<8x32xf32> to vector<1x8x32xf32>
    tpu.vector_store %arg5[%c0_94, %c0_95, %c0_96], %157 {strides = array<i32>} : memref<1x8x32xf32, #tpu.memory_space<vmem>>, vector<1x8x32xf32>,
    return
  }
  func.func @transform_0(%arg0: i32) -> (i32, i32, i32) {
    %c0_i32 = arith.constant 0 : i32
    %c0_i32_0 = arith.constant 0 : i32
    %c0_i32_1 = arith.constant 0 : i32
    return %arg0, %c0_i32, %c0_i32_0 : i32, i32, i32
  }
  func.func @transform_1(%arg0: i32) -> (i32, i32) {
    %c0_i32 = arith.constant 0 : i32
    %c0_i32_0 = arith.constant 0 : i32
    %c0_i32_1 = arith.constant 0 : i32
    return %c0_i32, %c0_i32_0 : i32, i32
  }
  func.func @transform_2(%arg0: i32) -> (i32, i32) {
    %c0_i32 = arith.constant 0 : i32
    %c0_i32_0 = arith.constant 0 : i32
    %c0_i32_1 = arith.constant 0 : i32
    return %c0_i32, %c0_i32_0 : i32, i32
  }
  func.func @transform_3(%arg0: i32) -> (i32, i32) {
    %c0_i32 = arith.constant 0 : i32
    %c0_i32_0 = arith.constant 0 : i32
    %c0_i32_1 = arith.constant 0 : i32
    return %c0_i32, %c0_i32_0 : i32, i32
  }
  func.func @transform_4(%arg0: i32) -> (i32, i32, i32) {
    %c0_i32 = arith.constant 0 : i32
    %c0_i32_0 = arith.constant 0 : i32
    %c0_i32_1 = arith.constant 0 : i32
    return %arg0, %c0_i32, %c0_i32_0 : i32, i32, i32
  }
}

</mosaic_0001>

<llo_original>
// kernel: tpu_custom_call.1
$region0: #{tpu_custom_call.1}
  #allocation0 [shape = 'u32[]', space=smem, size = 0x4, offset = 0x4, fixed_abs, tag = 'smem constant byte address 0x4 - core index']
  #allocation1 [shape = 'u32[72,128]{1,0:T(1,128)}', space=vmem, size = 0x9000, scoped, tag = 'internal scratch']
  #allocation2 [shape = 'f32[8,96]{1,0:T(8,128)}', space=vmem, size = 0x1000, scoped, tag = 'scratch operand']
  #allocation3 [shape = 'f32[8,32]{1,0:T(8,128)}', space=vmem, size = 0x1000, scoped, tag = 'scratch operand']
  %s0 = inlined_call_operand.hbm [shape: f32[2,8,32], index: 0, kind: input, shape index: {}]
  %s1 = inlined_call_operand.hbm [shape: f32[32,96], index: 1, kind: input, shape index: {}]
  %s2 = inlined_call_operand.hbm [shape: f32[32,32], index: 2, kind: input, shape index: {}]
  %s3 = inlined_call_operand.vmem [shape: f32[1,32], index: 3, kind: input, shape index: {}]
  %s4 = inlined_call_operand.hbm [shape: f32[2,8,32], index: 4, kind: output, shape index: {}]
  %s5 = sld [smem:[#allocation0]]
  $region61: #{tpu_custom_call.1} parent=0
    _
  %s7 = ssub.s32 1, %s5
  %s8 = scalar_select 0, %s7, %s5
  $region1: #{tpu_custom_call.1} parent=0
    #allocation4 [shape = 'u8[8192]{0}', space=vmem, size = 0x2000, scoped, tag = 'input window, operand 0']
    #allocation5 [shape = 's32[2]{0}', space=sflag, size = 0x8, scoped, tag = 'scoped memory for tpu_custom_call.1']
    #allocation6 [shape = 's32[2]{0}', space=sflag, size = 0x8, scoped, tag = 'scoped memory for tpu_custom_call.1']
    #allocation7 [shape = 'u8[16384]{0}', space=vmem, size = 0x4000, scoped, tag = 'input window, operand 1, single buffered']
    #allocation8 [shape = 's32[1]{0}', space=sflag, size = 0x4, scoped, tag = 'scoped memory for tpu_custom_call.1']
    #allocation9 [shape = 'u8[16384]{0}', space=vmem, size = 0x4000, scoped, tag = 'input window, operand 2, single buffered']
    #allocation10 [shape = 'u8[8192]{0}', space=vmem, size = 0x2000, scoped, tag = 'output window, operand 0']
    %9 = vsyncpa [#allocation5], 0
    %s10 = scalar_lea.sflag [#allocation5], 1
    %11 = vsyncpa %s10, 0
    %12 = vsyncpa [#allocation8], 0
    %13 = vsyncpa [#allocation6], 0
    %s14 = scalar_lea.sflag [#allocation6], 1
    %15 = vsyncpa %s14, 0
    loop: start=0, step=1, limit=4
    $region2: #{tpu_custom_call.1} parent=1 // loop_pre_header
      _
    $region3: #{tpu_custom_call.1} parent=1 // loop_header
      %s17 = sphi 0, %s21
      %p18 = scmp.ge.s32.totalorder %s17, 4
      %s27 = sphi 0, %s29
      %s30 = sphi 0, %s27
      %s31 = sphi 0, %s30
      %s47 = sphi 0, %s31
      %s51 = sphi 0, %s51
      %s53 = sphi 0, %s51
      %s54 = sphi 0, %s53
      %s68 = sphi 0, %s54
      %s72 = sphi 0, %s72
      %s74 = sphi 0, %s72
      %s75 = sphi 0, %s74
      %s89 = sphi 0, %s75
      %s93 = sphi 0, %s93
      %s95 = sphi 0, %s93
      %s96 = sphi 0, %s95
      %s110 = sphi 0, %s96
      %s116 = sphi 0, %s118
      %s119 = sphi 0, %s116
      %s120 = sphi 0, %s119
      %s136 = sphi 0, %s120
    $region4: #{tpu_custom_call.1} parent=1 // loop_header_branch
      %20 = sbr.rel (%p18) target = $region8
    $region5: #{tpu_custom_call.1} parent=1 // loop_body
      %s22 = ssub.s32 %s17, 1
      %s23 = ssub.s32 %s17, 2
      %s24 = sadd.s32 %s17, 1
      %s25 = ssub.s32 %s17, %s24
      %p26 = scmp.eq.s32.totalorder %s25, 0
      %s28 = sadd.s32 %s27, 1
      %s29 = scalar_select %p26, %s27, %s28
      %p32 = pneg %p26
      %p33 = scmp.eq.s32.totalorder %s17, 1
      %p34 = por %p32, %p33
      %p35 = scmp.ne.s32.totalorder %s27, %s30
      %p36 = scmp.eq.s32.totalorder %s17, 0
      %p37 = por %p35, %p36
      %p38 = scmp.ne.s32.totalorder %s27, %s30
      %p39 = scmp.eq.s32.totalorder %s22, 1
      %p40 = por %p38, %p39
      %p41 = scmp.ne.s32.totalorder %s30, %s31
      %p42 = scmp.eq.s32.totalorder %s22, 0
      %p43 = por %p41, %p42
      %p44 = scmp.ne.s32.totalorder %s30, %s31
      %p45 = scmp.eq.s32.totalorder %s23, 1
      %p46 = por %p44, %p45
      %p48 = scmp.ne.s32.totalorder %s31, %s47
      %p49 = scmp.eq.s32.totalorder %s23, 0
      %p50 = por %p48, %p49
      %s52 = sadd.s32 %s51, 1
      %p55 = scmp.eq.s32.totalorder %s17, 1
      %p56 = scmp.ne.s32.totalorder %s51, %s53
      %p57 = scmp.eq.s32.totalorder %s17, 0
      %p58 = por %p56, %p57
      %p59 = scmp.ne.s32.totalorder %s51, %s53
      %p60 = scmp.eq.s32.totalorder %s22, 1
      %p61 = por %p59, %p60
      %p62 = scmp.ne.s32.totalorder %s53, %s54
      %p63 = scmp.eq.s32.totalorder %s22, 0
      %p64 = por %p62, %p63
      %p65 = scmp.ne.s32.totalorder %s53, %s54
      %p66 = scmp.eq.s32.totalorder %s23, 1
      %p67 = por %p65, %p66
      %p69 = scmp.ne.s32.totalorder %s54, %s68
      %p70 = scmp.eq.s32.totalorder %s23, 0
      %p71 = por %p69, %p70
      %s73 = sadd.s32 %s72, 1
      %p76 = scmp.eq.s32.totalorder %s17, 1
      %p77 = scmp.ne.s32.totalorder %s72, %s74
      %p78 = scmp.eq.s32.totalorder %s17, 0
      %p79 = por %p77, %p78
      %p80 = scmp.ne.s32.totalorder %s72, %s74
      %p81 = scmp.eq.s32.totalorder %s22, 1
      %p82 = por %p80, %p81
      %p83 = scmp.ne.s32.totalorder %s74, %s75
      %p84 = scmp.eq.s32.totalorder %s22, 0
      %p85 = por %p83, %p84
      %p86 = scmp.ne.s32.totalorder %s74, %s75
      %p87 = scmp.eq.s32.totalorder %s23, 1
      %p88 = por %p86, %p87
      %p90 = scmp.ne.s32.totalorder %s75, %s89
      %p91 = scmp.eq.s32.totalorder %s23, 0
      %p92 = por %p90, %p91
      %s94 = sadd.s32 %s93, 1
      %p97 = scmp.eq.s32.totalorder %s17, 1
      %p98 = scmp.ne.s32.totalorder %s93, %s95
      %p99 = scmp.eq.s32.totalorder %s17, 0
      %p100 = por %p98, %p99
      %p101 = scmp.ne.s32.totalorder %s93, %s95
      %p102 = scmp.eq.s32.totalorder %s22, 1
      %p103 = por %p101, %p102
      %p104 = scmp.ne.s32.totalorder %s95, %s96
      %p105 = scmp.eq.s32.totalorder %s22, 0
      %p106 = por %p104, %p105
      %p107 = scmp.ne.s32.totalorder %s95, %s96
      %p108 = scmp.eq.s32.totalorder %s23, 1
      %p109 = por %p107, %p108
      %p111 = scmp.ne.s32.totalorder %s96, %s110
      %p112 = scmp.eq.s32.totalorder %s23, 0
      %p113 = por %p111, %p112
      %s114 = ssub.s32 %s17, %s24
      %p115 = scmp.eq.s32.totalorder %s114, 0
      %s117 = sadd.s32 %s116, 1
      %s118 = scalar_select %p115, %s116, %s117
      %p121 = pneg %p115
      %p122 = scmp.eq.s32.totalorder %s17, 1
      %p123 = por %p121, %p122
      %p124 = scmp.ne.s32.totalorder %s116, %s119
      %p125 = scmp.eq.s32.totalorder %s17, 0
      %p126 = por %p124, %p125
      %p127 = scmp.ne.s32.totalorder %s116, %s119
      %p128 = scmp.eq.s32.totalorder %s22, 1
      %p129 = por %p127, %p128
      %p130 = scmp.ne.s32.totalorder %s119, %s120
      %p131 = scmp.eq.s32.totalorder %s22, 0
      %p132 = por %p130, %p131
      %p133 = scmp.ne.s32.totalorder %s119, %s120
      %p134 = scmp.eq.s32.totalorder %s23, 1
      %p135 = por %p133, %p134
      %p137 = scmp.ne.s32.totalorder %s120, %s136
      %p138 = scmp.eq.s32.totalorder %s23, 0
      %p139 = por %p137, %p138
      %p140 = scmp.le.s32.totalorder 1, %s17
      %p141 = scmp.lt.s32.totalorder %s17, 3
      %p142 = pnand %p140, %p141
      %p143 = pneg %p142
      // Predicated region
      $region9: #{tpu_custom_call.1} parent=5 // pred_check
        _
      $region10: #{tpu_custom_call.1} parent=5 // pred_check_branch
        %145 = sbr.rel (%p142) target = $region12
      $region11: #{tpu_custom_call.1} parent=5 // pred_region
        %s146 = ssub.s32 %s17, 1
        // Predicated region
        $region13: #{tpu_custom_call.1} parent=11 // pred_check
          %p147 = pneg %p64
        $region14: #{tpu_custom_call.1} parent=11 // pred_check_branch
          %149 = sbr.rel (%p147) target = $region16
        $region15: #{tpu_custom_call.1} parent=11 // pred_region
          %151 = vsyncadd [#allocation8], 0
          %s152 = sshll.u32 %s1, 4
          %s153 = int_to_ptr.hbm [resolvable:$true] %s152
          %s154 = sshll.u32 [#allocation7], 4
          %s155 = int_to_ptr.vmem [resolvable:$true] %s154
          %160 = dma.hbm_to_vmem [thread:$0]  %s153, 512, %s155, [#allocation8], 128, 128, 8
        $region16: #{tpu_custom_call.1} parent=11 // pred_fallthru
          _
        // Predicated region
        $region17: #{tpu_custom_call.1} parent=11 // pred_check
          %p161 = pneg %p85
        $region18: #{tpu_custom_call.1} parent=11 // pred_check_branch
          %163 = sbr.rel (%p161) target = $region20
        $region19: #{tpu_custom_call.1} parent=11 // pred_region
          %165 = vsyncadd [#allocation8], 0
          %s166 = sshll.u32 %s2, 4
          %s167 = int_to_ptr.hbm [resolvable:$true] %s166
          %s168 = sshll.u32 [#allocation9], 4
          %s169 = int_to_ptr.vmem [resolvable:$true] %s168
          %174 = dma.hbm_to_vmem [thread:$0]  %s167, 512, %s169, [#allocation8], 128, 128, 8
        $region20: #{tpu_custom_call.1} parent=11 // pred_fallthru
          _
        // Predicated region
        $region21: #{tpu_custom_call.1} parent=11 // pred_check
          %p175 = pneg %p106
        $region22: #{tpu_custom_call.1} parent=11 // pred_check_branch
          %177 = sbr.rel (%p175) target = $region24
        $region23: #{tpu_custom_call.1} parent=11 // pred_region
          _
        $region24: #{tpu_custom_call.1} parent=11 // pred_fallthru
          _
      $region12: #{tpu_custom_call.1} parent=5 // pred_fallthru
        _
      %p178 = scmp.lt.s32.totalorder %s17, 2
      // Predicated region
      $region25: #{tpu_custom_call.1} parent=5 // pred_check
        %p179 = pneg %p178
      $region26: #{tpu_custom_call.1} parent=5 // pred_check_branch
        %181 = sbr.rel (%p179) target = $region28
      $region27: #{tpu_custom_call.1} parent=5 // pred_region
        // Predicated region
        $region29: #{tpu_custom_call.1} parent=27 // pred_check
          %p182 = pneg %p37
        $region30: #{tpu_custom_call.1} parent=27 // pred_check_branch
          %184 = sbr.rel (%p182) target = $region32
        $region31: #{tpu_custom_call.1} parent=27 // pred_region
          %s185 = sand.u32 %s27, 1
          %s186 = scalar_lea.sflag [#allocation5], %s185
          %s187 = sand.u32 %s27, 1
          %s188 = smul.addr %s187, 8
          %s189 = scalar_lea.vmem [#allocation4], %s188
          %191 = vsyncadd %s186, 0
          %s192 = smul.addr %s17, 8
          %s193 = scalar_lea.hbm %s0, %s192
          %s195 = sshll.u32 %s193, 4
          %s196 = int_to_ptr.hbm [resolvable:$true] %s195
          %s197 = sshll.u32 %s189, 4
          %s198 = int_to_ptr.vmem [resolvable:$true] %s197
          %200 = dma.hbm_to_vmem [thread:$0]  %s196, 128, %s198, %s186
        $region32: #{tpu_custom_call.1} parent=27 // pred_fallthru
          _
      $region28: #{tpu_custom_call.1} parent=5 // pred_fallthru
        _
      %p201 = scmp.le.s32.totalorder 1, %s17
      %p202 = scmp.lt.s32.totalorder %s17, 3
      %p203 = pnand %p201, %p202
      %p204 = pneg %p203
      // Predicated region
      $region33: #{tpu_custom_call.1} parent=5 // pred_check
        _
      $region34: #{tpu_custom_call.1} parent=5 // pred_check_branch
        %206 = sbr.rel (%p203) target = $region36
      $region35: #{tpu_custom_call.1} parent=5 // pred_region
        %s207 = ssub.s32 %s17, 1
        %s208 = sand.u32 %s30, 1
        %s209 = scalar_lea.sflag [#allocation5], %s208
        %s210 = sand.u32 %s30, 1
        %s211 = smul.addr %s210, 8
        %s212 = scalar_lea.vmem [#allocation4], %s211
        // Predicated region
        $region37: #{tpu_custom_call.1} parent=35 // pred_check
          %p213 = pneg %p43
        $region38: #{tpu_custom_call.1} parent=35 // pred_check_branch
          %215 = sbr.rel (%p213) target = $region40
        $region39: #{tpu_custom_call.1} parent=35 // pred_region
          %217 = dma.done %s209, 128
        $region40: #{tpu_custom_call.1} parent=35 // pred_fallthru
          _
        // Predicated region
        $region41: #{tpu_custom_call.1} parent=35 // pred_check
          %p218 = pneg %p64
        $region42: #{tpu_custom_call.1} parent=35 // pred_check_branch
          %220 = sbr.rel (%p218) target = $region44
        $region43: #{tpu_custom_call.1} parent=35 // pred_region
          %222 = dma.done [#allocation8], 512
        $region44: #{tpu_custom_call.1} parent=35 // pred_fallthru
          _
        // Predicated region
        $region45: #{tpu_custom_call.1} parent=35 // pred_check
          %p223 = pneg %p85
        $region46: #{tpu_custom_call.1} parent=35 // pred_check_branch
          %225 = sbr.rel (%p223) target = $region48
        $region47: #{tpu_custom_call.1} parent=35 // pred_region
          %227 = dma.done [#allocation8], 512
        $region48: #{tpu_custom_call.1} parent=35 // pred_fallthru
          _
        %s228 = sand.u32 %s30, 1
        %s229 = scalar_lea.sflag [#allocation5], %s228
        %s230 = sand.u32 %s30, 1
        %s231 = smul.addr %s230, 8
        %s232 = scalar_lea.vmem [#allocation4], %s231
        %p233 = pneg %p43
        %p234 = pneg %p40
        %p235 = pneg %p64
        %p236 = pneg %p61
        %p237 = pneg %p85
        %p238 = pneg %p82
        %p239 = pneg %p106
        %p240 = pneg %p103
        %p241 = pneg %p132
        %p242 = pneg %p129
        %s243 = sand.u32 %s119, 1
        %s244 = scalar_lea.sflag [#allocation6], %s243
        %s245 = sand.u32 %s119, 1
        %s246 = smul.addr %s245, 8
        %s247 = scalar_lea.vmem [#allocation10], %s246
        %v248 = vld [vmem:[%s212] sm:$0xff]
        %v249 = vld [vmem:[#allocation7] sm:$0xff]
        %v250 = vld [vmem:[#allocation7 + $0x8] sm:$0xff]
        %v251 = vld [vmem:[#allocation7 + $0x10] sm:$0xff]
        %v252 = vld [vmem:[#allocation7 + $0x18] sm:$0xff]
        %vm253 = vcmask 261120
        %v255 = vsel %vm253, %v248, 0
        %257 = vmatpush.msra.mxu0 0.0
        %258 = vmatpush.msra.mxu0 0.0
        %259 = vmatpush.msra.mxu0 0.0
        %260 = vmatpush.msra.mxu0 0.0
        %261 = vmatpush.msra.mxu0 0.0
        %262 = vmatpush.msra.mxu0 0.0
        %263 = vmatpush.msra.mxu0 0.0
        %264 = vmatpush.msra.mxu0 0.0
        %265 = vmatpush.msra.mxu0 0.0
        %266 = vmatpush.msra.mxu0 0.0
        %267 = vmatpush.msra.mxu0 0.0
        %268 = vmatpush.msra.mxu0 0.0
        %269 = vmatpush.msra.mxu0 %v252
        %270 = vmatpush.msra.mxu0 %v251
        %271 = vmatpush.msra.mxu0 %v250
        %272 = vmatpush.msra.mxu0 %v249
        %273 = vmatmul.f32.gmra.mxu0 %v255
        %v274 = vpop.f32.mrf.mxu0
        %v275 = vadd.f32 0.0, %v274
        %276 = vdwg.mxu0
        %vm277 = vcmask 785408
        %278 = vst.msk [vmem:[#allocation2] sm:$0xff] %vm277, %v275
        %v279 = vld [vmem:[#allocation2] sm:$0xff]
        %v280 = vmul.f32 %v279, 0.5
        %282 = vrot.lane.b32.xlu0 %v279, 96
        %v283 = vpop.permute.xlu0 %282
        %vm284 = vcmask 31744
        %v286 = vsel %vm284, %v280, 0
        %v288 = vsel %vm284, %v283, 0
        %290 = vmatpush.xpose.msra.mxu0 0.0
        %291 = vmatpush.xpose.msra.mxu0 0.0
        %292 = vmatpush.xpose.msra.mxu0 0.0
        %293 = vmatpush.xpose.msra.mxu0 0.0
        %294 = vmatpush.xpose.msra.mxu0 0.0
        %295 = vmatpush.xpose.msra.mxu0 0.0
        %296 = vmatpush.xpose.msra.mxu0 0.0
        %297 = vmatpush.xpose.msra.mxu0 0.0
        %298 = vmatpush.xpose.msra.mxu0 0.0
        %299 = vmatpush.xpose.msra.mxu0 0.0
        %300 = vmatpush.xpose.msra.mxu0 0.0
        %301 = vmatpush.xpose.msra.mxu0 0.0
        %302 = vmatpush.xpose.msra.mxu0 0.0
        %303 = vmatpush.xpose.msra.mxu0 0.0
        %304 = vmatpush.xpose.msra.mxu0 0.0
        %305 = vmatpush.xpose.msra.mxu0 %v288
        %306 = vmatmul.f32.gmra.mxu0 %v286
        %v307 = vpop.f32.mrf.mxu0
        %v308 = vadd.f32 0.0, %v307
        %309 = vdwg.mxu0
        %vm310 = vcmask 64512
        %v311 = vsel %vm310, %v308, -inf
        %312 = vmax.xlane.f32.xlu0 %v311
        %v313 = vpop.xlane.xlu0 %312
        %v314 = vsub.f32 %v308, %v313
        %v315 = vmul.f32 %v314, 1.442695
        %v316 = vpow.pop %v315
        %v317 = vsel %vm310, %v316, 0.0
        %318 = vadd.xlane.f32.xlu0 %v317
        %v319 = vpop.xlane.xlu0 %318
        %v320 = vrcp.pop %v319
        %v321 = vmul.f32 %v316, %v320
        %322 = vrot.lane.b32.xlu0 %v279, 64
        %v323 = vpop.permute.xlu0 %322
        %v326 = vsel %vm310, %v321, 0
        %328 = vmatpush.msra.mxu0 0.0
        %329 = vmatpush.msra.mxu0 0.0
        %330 = vmatpush.msra.mxu0 0.0
        %331 = vmatpush.msra.mxu0 0.0
        %332 = vmatpush.msra.mxu0 0.0
        %333 = vmatpush.msra.mxu0 0.0
        %334 = vmatpush.msra.mxu0 0.0
        %335 = vmatpush.msra.mxu0 0.0
        %336 = vmatpush.msra.mxu0 0.0
        %337 = vmatpush.msra.mxu0 0.0
        %338 = vmatpush.msra.mxu0 0.0
        %339 = vmatpush.msra.mxu0 0.0
        %340 = vmatpush.msra.mxu0 0.0
        %341 = vmatpush.msra.mxu0 0.0
        %342 = vmatpush.msra.mxu0 0.0
        %343 = vmatpush.msra.mxu0 %v323
        %344 = vmatmul.f32.gmra.mxu0 %v326
        %v345 = vpop.f32.mrf.mxu0
        %v346 = vadd.f32 0.0, %v345
        %347 = vdwg.mxu0
        %348 = vst.msk [vmem:[#allocation3] sm:$0xff] %vm284, %v346
        %v349 = vld [vmem:[#allocation2] sm:$0xff]
        %v350 = vmul.f32 %v349, 0.5
        %352 = vrot.lane.b32.xlu0 %v350, 124
        %v353 = vpop.permute.xlu0 %352
        %355 = vrot.lane.b32.xlu0 %v349, 92
        %v356 = vpop.permute.xlu0 %355
        %v357 = vsel %vm284, %v353, 0
        %v359 = vsel %vm284, %v356, 0
        %361 = vmatpush.xpose.msra.mxu0 0.0
        %362 = vmatpush.xpose.msra.mxu0 0.0
        %363 = vmatpush.xpose.msra.mxu0 0.0
        %364 = vmatpush.xpose.msra.mxu0 0.0
        %365 = vmatpush.xpose.msra.mxu0 0.0
        %366 = vmatpush.xpose.msra.mxu0 0.0
        %367 = vmatpush.xpose.msra.mxu0 0.0
        %368 = vmatpush.xpose.msra.mxu0 0.0
        %369 = vmatpush.xpose.msra.mxu0 0.0
        %370 = vmatpush.xpose.msra.mxu0 0.0
        %371 = vmatpush.xpose.msra.mxu0 0.0
        %372 = vmatpush.xpose.msra.mxu0 0.0
        %373 = vmatpush.xpose.msra.mxu0 0.0
        %374 = vmatpush.xpose.msra.mxu0 0.0
        %375 = vmatpush.xpose.msra.mxu0 0.0
        %376 = vmatpush.xpose.msra.mxu0 %v359
        %377 = vmatmul.f32.gmra.mxu0 %v357
        %v378 = vpop.f32.mrf.mxu0
        %v379 = vadd.f32 0.0, %v378
        %380 = vdwg.mxu0
        %v381 = vsel %vm310, %v379, -inf
        %382 = vmax.xlane.f32.xlu0 %v381
        %v383 = vpop.xlane.xlu0 %382
        %v384 = vsub.f32 %v379, %v383
        %v385 = vmul.f32 %v384, 1.442695
        %v386 = vpow.pop %v385
        %v387 = vsel %vm310, %v386, 0.0
        %388 = vadd.xlane.f32.xlu0 %v387
        %v389 = vpop.xlane.xlu0 %388
        %v390 = vrcp.pop %v389
        %v391 = vmul.f32 %v386, %v390
        %392 = vrot.lane.b32.xlu0 %v349, 60
        %v393 = vpop.permute.xlu0 %392
        %v396 = vsel %vm310, %v391, 0
        %398 = vmatpush.msra.mxu0 0.0
        %399 = vmatpush.msra.mxu0 0.0
        %400 = vmatpush.msra.mxu0 0.0
        %401 = vmatpush.msra.mxu0 0.0
        %402 = vmatpush.msra.mxu0 0.0
        %403 = vmatpush.msra.mxu0 0.0
        %404 = vmatpush.msra.mxu0 0.0
        %405 = vmatpush.msra.mxu0 0.0
        %406 = vmatpush.msra.mxu0 0.0
        %407 = vmatpush.msra.mxu0 0.0
        %408 = vmatpush.msra.mxu0 0.0
        %409 = vmatpush.msra.mxu0 0.0
        %410 = vmatpush.msra.mxu0 0.0
        %411 = vmatpush.msra.mxu0 0.0
        %412 = vmatpush.msra.mxu0 0.0
        %413 = vmatpush.msra.mxu0 %v393
        %414 = vmatmul.f32.gmra.mxu0 %v396
        %v415 = vpop.f32.mrf.mxu0
        %v416 = vadd.f32 0.0, %v415
        %417 = vdwg.mxu0
        %419 = vrot.lane.b32.xlu0 %v416, 4
        %v420 = vpop.permute.xlu0 %419
        %vm422 = vcmask 64544
        %423 = vst.msk [vmem:[#allocation3] sm:$0xff] %vm422, %v420
        %v424 = vld [vmem:[#allocation2] sm:$0xff]
        %v425 = vmul.f32 %v424, 0.5
        %427 = vrot.lane.b32.xlu0 %v425, 120
        %v428 = vpop.permute.xlu0 %427
        %430 = vrot.lane.b32.xlu0 %v424, 88
        %v431 = vpop.permute.xlu0 %430
        %v432 = vsel %vm284, %v428, 0
        %v434 = vsel %vm284, %v431, 0
        %436 = vmatpush.xpose.msra.mxu0 0.0
        %437 = vmatpush.xpose.msra.mxu0 0.0
        %438 = vmatpush.xpose.msra.mxu0 0.0
        %439 = vmatpush.xpose.msra.mxu0 0.0
        %440 = vmatpush.xpose.msra.mxu0 0.0
        %441 = vmatpush.xpose.msra.mxu0 0.0
        %442 = vmatpush.xpose.msra.mxu0 0.0
        %443 = vmatpush.xpose.msra.mxu0 0.0
        %444 = vmatpush.xpose.msra.mxu0 0.0
        %445 = vmatpush.xpose.msra.mxu0 0.0
        %446 = vmatpush.xpose.msra.mxu0 0.0
        %447 = vmatpush.xpose.msra.mxu0 0.0
        %448 = vmatpush.xpose.msra.mxu0 0.0
        %449 = vmatpush.xpose.msra.mxu0 0.0
        %450 = vmatpush.xpose.msra.mxu0 0.0
        %451 = vmatpush.xpose.msra.mxu0 %v434
        %452 = vmatmul.f32.gmra.mxu0 %v432
        %v453 = vpop.f32.mrf.mxu0
        %v454 = vadd.f32 0.0, %v453
        %455 = vdwg.mxu0
        %v456 = vsel %vm310, %v454, -inf
        %457 = vmax.xlane.f32.xlu0 %v456
        %v458 = vpop.xlane.xlu0 %457
        %v459 = vsub.f32 %v454, %v458
        %v460 = vmul.f32 %v459, 1.442695
        %v461 = vpow.pop %v460
        %v462 = vsel %vm310, %v461, 0.0
        %463 = vadd.xlane.f32.xlu0 %v462
        %v464 = vpop.xlane.xlu0 %463
        %v465 = vrcp.pop %v464
        %v466 = vmul.f32 %v461, %v465
        %467 = vrot.lane.b32.xlu0 %v424, 56
        %v468 = vpop.permute.xlu0 %467
        %v471 = vsel %vm310, %v466, 0
        %473 = vmatpush.msra.mxu0 0.0
        %474 = vmatpush.msra.mxu0 0.0
        %475 = vmatpush.msra.mxu0 0.0
        %476 = vmatpush.msra.mxu0 0.0
        %477 = vmatpush.msra.mxu0 0.0
        %478 = vmatpush.msra.mxu0 0.0
        %479 = vmatpush.msra.mxu0 0.0
        %480 = vmatpush.msra.mxu0 0.0
        %481 = vmatpush.msra.mxu0 0.0
        %482 = vmatpush.msra.mxu0 0.0
        %483 = vmatpush.msra.mxu0 0.0
        %484 = vmatpush.msra.mxu0 0.0
        %485 = vmatpush.msra.mxu0 0.0
        %486 = vmatpush.msra.mxu0 0.0
        %487 = vmatpush.msra.mxu0 0.0
        %488 = vmatpush.msra.mxu0 %v468
        %489 = vmatmul.f32.gmra.mxu0 %v471
        %v490 = vpop.f32.mrf.mxu0
        %v491 = vadd.f32 0.0, %v490
        %492 = vdwg.mxu0
        %494 = vrot.lane.b32.xlu0 %v491, 8
        %v495 = vpop.permute.xlu0 %494
        %vm497 = vcmask 97344
        %498 = vst.msk [vmem:[#allocation3] sm:$0xff] %vm497, %v495
        %v499 = vld [vmem:[#allocation2] sm:$0xff]
        %v500 = vmul.f32 %v499, 0.5
        %502 = vrot.lane.b32.xlu0 %v500, 116
        %v503 = vpop.permute.xlu0 %502
        %505 = vrot.lane.b32.xlu0 %v499, 84
        %v506 = vpop.permute.xlu0 %505
        %v507 = vsel %vm284, %v503, 0
        %v509 = vsel %vm284, %v506, 0
        %511 = vmatpush.xpose.msra.mxu0 0.0
        %512 = vmatpush.xpose.msra.mxu0 0.0
        %513 = vmatpush.xpose.msra.mxu0 0.0
        %514 = vmatpush.xpose.msra.mxu0 0.0
        %515 = vmatpush.xpose.msra.mxu0 0.0
        %516 = vmatpush.xpose.msra.mxu0 0.0
        %517 = vmatpush.xpose.msra.mxu0 0.0
        %518 = vmatpush.xpose.msra.mxu0 0.0
        %519 = vmatpush.xpose.msra.mxu0 0.0
        %520 = vmatpush.xpose.msra.mxu0 0.0
        %521 = vmatpush.xpose.msra.mxu0 0.0
        %522 = vmatpush.xpose.msra.mxu0 0.0
        %523 = vmatpush.xpose.msra.mxu0 0.0
        %524 = vmatpush.xpose.msra.mxu0 0.0
        %525 = vmatpush.xpose.msra.mxu0 0.0
        %526 = vmatpush.xpose.msra.mxu0 %v509
        %527 = vmatmul.f32.gmra.mxu0 %v507
        %v528 = vpop.f32.mrf.mxu0
        %v529 = vadd.f32 0.0, %v528
        %530 = vdwg.mxu0
        %v531 = vsel %vm310, %v529, -inf
        %532 = vmax.xlane.f32.xlu0 %v531
        %v533 = vpop.xlane.xlu0 %532
        %v534 = vsub.f32 %v529, %v533
        %v535 = vmul.f32 %v534, 1.442695
        %v536 = vpow.pop %v535
        %v537 = vsel %vm310, %v536, 0.0
        %538 = vadd.xlane.f32.xlu0 %v537
        %v539 = vpop.xlane.xlu0 %538
        %v540 = vrcp.pop %v539
        %v541 = vmul.f32 %v536, %v540
        %542 = vrot.lane.b32.xlu0 %v499, 52
        %v543 = vpop.permute.xlu0 %542
        %v546 = vsel %vm310, %v541, 0
        %548 = vmatpush.msra.mxu0 0.0
        %549 = vmatpush.msra.mxu0 0.0
        %550 = vmatpush.msra.mxu0 0.0
        %551 = vmatpush.msra.mxu0 0.0
        %552 = vmatpush.msra.mxu0 0.0
        %553 = vmatpush.msra.mxu0 0.0
        %554 = vmatpush.msra.mxu0 0.0
        %555 = vmatpush.msra.mxu0 0.0
        %556 = vmatpush.msra.mxu0 0.0
        %557 = vmatpush.msra.mxu0 0.0
        %558 = vmatpush.msra.mxu0 0.0
        %559 = vmatpush.msra.mxu0 0.0
        %560 = vmatpush.msra.mxu0 0.0
        %561 = vmatpush.msra.mxu0 0.0
        %562 = vmatpush.msra.mxu0 0.0
        %563 = vmatpush.msra.mxu0 %v543
        %564 = vmatmul.f32.gmra.mxu0 %v546
        %v565 = vpop.f32.mrf.mxu0
        %v566 = vadd.f32 0.0, %v565
        %567 = vdwg.mxu0
        %569 = vrot.lane.b32.xlu0 %v566, 12
        %v570 = vpop.permute.xlu0 %569
        %vm572 = vcmask 130144
        %573 = vst.msk [vmem:[#allocation3] sm:$0xff] %vm572, %v570
        %v574 = vld [vmem:[#allocation2] sm:$0xff]
        %v575 = vmul.f32 %v574, 0.5
        %577 = vrot.lane.b32.xlu0 %v575, 112
        %v578 = vpop.permute.xlu0 %577
        %580 = vrot.lane.b32.xlu0 %v574, 80
        %v581 = vpop.permute.xlu0 %580
        %v582 = vsel %vm284, %v578, 0
        %v584 = vsel %vm284, %v581, 0
        %586 = vmatpush.xpose.msra.mxu0 0.0
        %587 = vmatpush.xpose.msra.mxu0 0.0
        %588 = vmatpush.xpose.msra.mxu0 0.0
        %589 = vmatpush.xpose.msra.mxu0 0.0
        %590 = vmatpush.xpose.msra.mxu0 0.0
        %591 = vmatpush.xpose.msra.mxu0 0.0
        %592 = vmatpush.xpose.msra.mxu0 0.0
        %593 = vmatpush.xpose.msra.mxu0 0.0
        %594 = vmatpush.xpose.msra.mxu0 0.0
        %595 = vmatpush.xpose.msra.mxu0 0.0
        %596 = vmatpush.xpose.msra.mxu0 0.0
        %597 = vmatpush.xpose.msra.mxu0 0.0
        %598 = vmatpush.xpose.msra.mxu0 0.0
        %599 = vmatpush.xpose.msra.mxu0 0.0
        %600 = vmatpush.xpose.msra.mxu0 0.0
        %601 = vmatpush.xpose.msra.mxu0 %v584
        %602 = vmatmul.f32.gmra.mxu0 %v582
        %v603 = vpop.f32.mrf.mxu0
        %v604 = vadd.f32 0.0, %v603
        %605 = vdwg.mxu0
        %v606 = vsel %vm310, %v604, -inf
        %607 = vmax.xlane.f32.xlu0 %v606
        %v608 = vpop.xlane.xlu0 %607
        %v609 = vsub.f32 %v604, %v608
        %v610 = vmul.f32 %v609, 1.442695
        %v611 = vpow.pop %v610
        %v612 = vsel %vm310, %v611, 0.0
        %613 = vadd.xlane.f32.xlu0 %v612
        %v614 = vpop.xlane.xlu0 %613
        %v615 = vrcp.pop %v614
        %v616 = vmul.f32 %v611, %v615
        %617 = vrot.lane.b32.xlu0 %v574, 48
        %v618 = vpop.permute.xlu0 %617
        %v621 = vsel %vm310, %v616, 0
        %623 = vmatpush.msra.mxu0 0.0
        %624 = vmatpush.msra.mxu0 0.0
        %625 = vmatpush.msra.mxu0 0.0
        %626 = vmatpush.msra.mxu0 0.0
        %627 = vmatpush.msra.mxu0 0.0
        %628 = vmatpush.msra.mxu0 0.0
        %629 = vmatpush.msra.mxu0 0.0
        %630 = vmatpush.msra.mxu0 0.0
        %631 = vmatpush.msra.mxu0 0.0
        %632 = vmatpush.msra.mxu0 0.0
        %633 = vmatpush.msra.mxu0 0.0
        %634 = vmatpush.msra.mxu0 0.0
        %635 = vmatpush.msra.mxu0 0.0
        %636 = vmatpush.msra.mxu0 0.0
        %637 = vmatpush.msra.mxu0 0.0
        %638 = vmatpush.msra.mxu0 %v618
        %639 = vmatmul.f32.gmra.mxu0 %v621
        %v640 = vpop.f32.mrf.mxu0
        %v641 = vadd.f32 0.0, %v640
        %642 = vdwg.mxu0
        %644 = vrot.lane.b32.xlu0 %v641, 16
        %v645 = vpop.permute.xlu0 %644
        %vm647 = vcmask 162944
        %648 = vst.msk [vmem:[#allocation3] sm:$0xff] %vm647, %v645
        %v649 = vld [vmem:[#allocation2] sm:$0xff]
        %v650 = vmul.f32 %v649, 0.5
        %652 = vrot.lane.b32.xlu0 %v650, 108
        %v653 = vpop.permute.xlu0 %652
        %655 = vrot.lane.b32.xlu0 %v649, 76
        %v656 = vpop.permute.xlu0 %655
        %v657 = vsel %vm284, %v653, 0
        %v659 = vsel %vm284, %v656, 0
        %661 = vmatpush.xpose.msra.mxu0 0.0
        %662 = vmatpush.xpose.msra.mxu0 0.0
        %663 = vmatpush.xpose.msra.mxu0 0.0
        %664 = vmatpush.xpose.msra.mxu0 0.0
        %665 = vmatpush.xpose.msra.mxu0 0.0
        %666 = vmatpush.xpose.msra.mxu0 0.0
        %667 = vmatpush.xpose.msra.mxu0 0.0
        %668 = vmatpush.xpose.msra.mxu0 0.0
        %669 = vmatpush.xpose.msra.mxu0 0.0
        %670 = vmatpush.xpose.msra.mxu0 0.0
        %671 = vmatpush.xpose.msra.mxu0 0.0
        %672 = vmatpush.xpose.msra.mxu0 0.0
        %673 = vmatpush.xpose.msra.mxu0 0.0
        %674 = vmatpush.xpose.msra.mxu0 0.0
        %675 = vmatpush.xpose.msra.mxu0 0.0
        %676 = vmatpush.xpose.msra.mxu0 %v659
        %677 = vmatmul.f32.gmra.mxu0 %v657
        %v678 = vpop.f32.mrf.mxu0
        %v679 = vadd.f32 0.0, %v678
        %680 = vdwg.mxu0
        %v681 = vsel %vm310, %v679, -inf
        %682 = vmax.xlane.f32.xlu0 %v681
        %v683 = vpop.xlane.xlu0 %682
        %v684 = vsub.f32 %v679, %v683
        %v685 = vmul.f32 %v684, 1.442695
        %v686 = vpow.pop %v685
        %v687 = vsel %vm310, %v686, 0.0
        %688 = vadd.xlane.f32.xlu0 %v687
        %v689 = vpop.xlane.xlu0 %688
        %v690 = vrcp.pop %v689
        %v691 = vmul.f32 %v686, %v690
        %692 = vrot.lane.b32.xlu0 %v649, 44
        %v693 = vpop.permute.xlu0 %692
        %v696 = vsel %vm310, %v691, 0
        %698 = vmatpush.msra.mxu0 0.0
        %699 = vmatpush.msra.mxu0 0.0
        %700 = vmatpush.msra.mxu0 0.0
        %701 = vmatpush.msra.mxu0 0.0
        %702 = vmatpush.msra.mxu0 0.0
        %703 = vmatpush.msra.mxu0 0.0
        %704 = vmatpush.msra.mxu0 0.0
        %705 = vmatpush.msra.mxu0 0.0
        %706 = vmatpush.msra.mxu0 0.0
        %707 = vmatpush.msra.mxu0 0.0
        %708 = vmatpush.msra.mxu0 0.0
        %709 = vmatpush.msra.mxu0 0.0
        %710 = vmatpush.msra.mxu0 0.0
        %711 = vmatpush.msra.mxu0 0.0
        %712 = vmatpush.msra.mxu0 0.0
        %713 = vmatpush.msra.mxu0 %v693
        %714 = vmatmul.f32.gmra.mxu0 %v696
        %v715 = vpop.f32.mrf.mxu0
        %v716 = vadd.f32 0.0, %v715
        %717 = vdwg.mxu0
        %719 = vrot.lane.b32.xlu0 %v716, 20
        %v720 = vpop.permute.xlu0 %719
        %vm722 = vcmask 195744
        %723 = vst.msk [vmem:[#allocation3] sm:$0xff] %vm722, %v720
        %v724 = vld [vmem:[#allocation2] sm:$0xff]
        %v725 = vmul.f32 %v724, 0.5
        %727 = vrot.lane.b32.xlu0 %v725, 104
        %v728 = vpop.permute.xlu0 %727
        %730 = vrot.lane.b32.xlu0 %v724, 72
        %v731 = vpop.permute.xlu0 %730
        %v732 = vsel %vm284, %v728, 0
        %v734 = vsel %vm284, %v731, 0
        %736 = vmatpush.xpose.msra.mxu0 0.0
        %737 = vmatpush.xpose.msra.mxu0 0.0
        %738 = vmatpush.xpose.msra.mxu0 0.0
        %739 = vmatpush.xpose.msra.mxu0 0.0
        %740 = vmatpush.xpose.msra.mxu0 0.0
        %741 = vmatpush.xpose.msra.mxu0 0.0
        %742 = vmatpush.xpose.msra.mxu0 0.0
        %743 = vmatpush.xpose.msra.mxu0 0.0
        %744 = vmatpush.xpose.msra.mxu0 0.0
        %745 = vmatpush.xpose.msra.mxu0 0.0
        %746 = vmatpush.xpose.msra.mxu0 0.0
        %747 = vmatpush.xpose.msra.mxu0 0.0
        %748 = vmatpush.xpose.msra.mxu0 0.0
        %749 = vmatpush.xpose.msra.mxu0 0.0
        %750 = vmatpush.xpose.msra.mxu0 0.0
        %751 = vmatpush.xpose.msra.mxu0 %v734
        %752 = vmatmul.f32.gmra.mxu0 %v732
        %v753 = vpop.f32.mrf.mxu0
        %v754 = vadd.f32 0.0, %v753
        %755 = vdwg.mxu0
        %v756 = vsel %vm310, %v754, -inf
        %757 = vmax.xlane.f32.xlu0 %v756
        %v758 = vpop.xlane.xlu0 %757
        %v759 = vsub.f32 %v754, %v758
        %v760 = vmul.f32 %v759, 1.442695
        %v761 = vpow.pop %v760
        %v762 = vsel %vm310, %v761, 0.0
        %763 = vadd.xlane.f32.xlu0 %v762
        %v764 = vpop.xlane.xlu0 %763
        %v765 = vrcp.pop %v764
        %v766 = vmul.f32 %v761, %v765
        %767 = vrot.lane.b32.xlu0 %v724, 40
        %v768 = vpop.permute.xlu0 %767
        %v771 = vsel %vm310, %v766, 0
        %773 = vmatpush.msra.mxu0 0.0
        %774 = vmatpush.msra.mxu0 0.0
        %775 = vmatpush.msra.mxu0 0.0
        %776 = vmatpush.msra.mxu0 0.0
        %777 = vmatpush.msra.mxu0 0.0
        %778 = vmatpush.msra.mxu0 0.0
        %779 = vmatpush.msra.mxu0 0.0
        %780 = vmatpush.msra.mxu0 0.0
        %781 = vmatpush.msra.mxu0 0.0
        %782 = vmatpush.msra.mxu0 0.0
        %783 = vmatpush.msra.mxu0 0.0
        %784 = vmatpush.msra.mxu0 0.0
        %785 = vmatpush.msra.mxu0 0.0
        %786 = vmatpush.msra.mxu0 0.0
        %787 = vmatpush.msra.mxu0 0.0
        %788 = vmatpush.msra.mxu0 %v768
        %789 = vmatmul.f32.gmra.mxu0 %v771
        %v790 = vpop.f32.mrf.mxu0
        %v791 = vadd.f32 0.0, %v790
        %792 = vdwg.mxu0
        %794 = vrot.lane.b32.xlu0 %v791, 24
        %v795 = vpop.permute.xlu0 %794
        %vm797 = vcmask 228544
        %798 = vst.msk [vmem:[#allocation3] sm:$0xff] %vm797, %v795
        %v799 = vld [vmem:[#allocation2] sm:$0xff]
        %v800 = vmul.f32 %v799, 0.5
        %802 = vrot.lane.b32.xlu0 %v800, 100
        %v803 = vpop.permute.xlu0 %802
        %805 = vrot.lane.b32.xlu0 %v799, 68
        %v806 = vpop.permute.xlu0 %805
        %v807 = vsel %vm284, %v803, 0
        %v809 = vsel %vm284, %v806, 0
        %811 = vmatpush.xpose.msra.mxu0 0.0
        %812 = vmatpush.xpose.msra.mxu0 0.0
        %813 = vmatpush.xpose.msra.mxu0 0.0
        %814 = vmatpush.xpose.msra.mxu0 0.0
        %815 = vmatpush.xpose.msra.mxu0 0.0
        %816 = vmatpush.xpose.msra.mxu0 0.0
        %817 = vmatpush.xpose.msra.mxu0 0.0
        %818 = vmatpush.xpose.msra.mxu0 0.0
        %819 = vmatpush.xpose.msra.mxu0 0.0
        %820 = vmatpush.xpose.msra.mxu0 0.0
        %821 = vmatpush.xpose.msra.mxu0 0.0
        %822 = vmatpush.xpose.msra.mxu0 0.0
        %823 = vmatpush.xpose.msra.mxu0 0.0
        %824 = vmatpush.xpose.msra.mxu0 0.0
        %825 = vmatpush.xpose.msra.mxu0 0.0
        %826 = vmatpush.xpose.msra.mxu0 %v809
        %827 = vmatmul.f32.gmra.mxu0 %v807
        %v828 = vpop.f32.mrf.mxu0
        %v829 = vadd.f32 0.0, %v828
        %830 = vdwg.mxu0
        %v831 = vsel %vm310, %v829, -inf
        %832 = vmax.xlane.f32.xlu0 %v831
        %v833 = vpop.xlane.xlu0 %832
        %v834 = vsub.f32 %v829, %v833
        %v835 = vmul.f32 %v834, 1.442695
        %v836 = vpow.pop %v835
        %v837 = vsel %vm310, %v836, 0.0
        %838 = vadd.xlane.f32.xlu0 %v837
        %v839 = vpop.xlane.xlu0 %838
        %v840 = vrcp.pop %v839
        %v841 = vmul.f32 %v836, %v840
        %842 = vrot.lane.b32.xlu0 %v799, 36
        %v843 = vpop.permute.xlu0 %842
        %v846 = vsel %vm310, %v841, 0
        %848 = vmatpush.msra.mxu0 0.0
        %849 = vmatpush.msra.mxu0 0.0
        %850 = vmatpush.msra.mxu0 0.0
        %851 = vmatpush.msra.mxu0 0.0
        %852 = vmatpush.msra.mxu0 0.0
        %853 = vmatpush.msra.mxu0 0.0
        %854 = vmatpush.msra.mxu0 0.0
        %855 = vmatpush.msra.mxu0 0.0
        %856 = vmatpush.msra.mxu0 0.0
        %857 = vmatpush.msra.mxu0 0.0
        %858 = vmatpush.msra.mxu0 0.0
        %859 = vmatpush.msra.mxu0 0.0
        %860 = vmatpush.msra.mxu0 0.0
        %861 = vmatpush.msra.mxu0 0.0
        %862 = vmatpush.msra.mxu0 0.0
        %863 = vmatpush.msra.mxu0 %v843
        %864 = vmatmul.f32.gmra.mxu0 %v846
        %v865 = vpop.f32.mrf.mxu0
        %v866 = vadd.f32 0.0, %v865
        %867 = vdwg.mxu0
        %869 = vrot.lane.b32.xlu0 %v866, 28
        %v870 = vpop.permute.xlu0 %869
        %vm872 = vcmask 261344
        %873 = vst.msk [vmem:[#allocation3] sm:$0xff] %vm872, %v870
        %v874 = vld [vmem:[#allocation3] sm:$0xff]
        %v875 = vld [vmem:[#allocation9] sm:$0xff]
        %v876 = vld [vmem:[#allocation9 + $0x8] sm:$0xff]
        %v877 = vld [vmem:[#allocation9 + $0x10] sm:$0xff]
        %v878 = vld [vmem:[#allocation9 + $0x18] sm:$0xff]
        %v879 = vld [vmem:[%s3] sm:$0x1]
        %v881 = vperm.slane %v879, 0
        %v884 = vsel %vm253, %v874, 0
        %886 = vmatpush.msra.mxu0 0.0
        %887 = vmatpush.msra.mxu0 0.0
        %888 = vmatpush.msra.mxu0 0.0
        %889 = vmatpush.msra.mxu0 0.0
        %890 = vmatpush.msra.mxu0 0.0
        %891 = vmatpush.msra.mxu0 0.0
        %892 = vmatpush.msra.mxu0 0.0
        %893 = vmatpush.msra.mxu0 0.0
        %894 = vmatpush.msra.mxu0 0.0
        %895 = vmatpush.msra.mxu0 0.0
        %896 = vmatpush.msra.mxu0 0.0
        %897 = vmatpush.msra.mxu0 0.0
        %898 = vmatpush.msra.mxu0 %v878
        %899 = vmatpush.msra.mxu0 %v877
        %900 = vmatpush.msra.mxu0 %v876
        %901 = vmatpush.msra.mxu0 %v875
        %902 = vmatmul.f32.gmra.mxu0 %v884
        %v903 = vpop.f32.mrf.mxu0
        %v904 = vadd.f32 %v881, %v903
        %905 = vdwg.mxu0
        %906 = vst.msk [vmem:[%s247] sm:$0xff] %vm253, %v904
        %s907 = sand.u32 %s119, 1
        %s908 = scalar_lea.sflag [#allocation6], %s907
        %s909 = sand.u32 %s119, 1
        %s910 = smul.addr %s909, 8
        %s911 = scalar_lea.vmem [#allocation10], %s910
        // Predicated region
        $region49: #{tpu_custom_call.1} parent=35 // pred_check
          %p912 = pneg %p129
        $region50: #{tpu_custom_call.1} parent=35 // pred_check_branch
          %914 = sbr.rel (%p912) target = $region52
        $region51: #{tpu_custom_call.1} parent=35 // pred_region
          %916 = vsyncadd %s908, 0
          %s917 = smul.addr %s22, 8
          %s918 = scalar_lea.hbm %s4, %s917
          %s920 = sshll.u32 %s911, 4
          %s921 = int_to_ptr.vmem [resolvable:$true] %s920
          %s922 = sshll.u32 %s918, 4
          %s923 = int_to_ptr.hbm [resolvable:$true] %s922
          %925 = dma.vmem_to_hbm [thread:$0]  %s921, 128, %s923, %s908
        $region52: #{tpu_custom_call.1} parent=35 // pred_fallthru
          _
      $region36: #{tpu_custom_call.1} parent=5 // pred_fallthru
        _
      %p926 = scmp.le.s32.totalorder 2, %s17
      // Predicated region
      $region53: #{tpu_custom_call.1} parent=5 // pred_check
        %p927 = pneg %p926
      $region54: #{tpu_custom_call.1} parent=5 // pred_check_branch
        %929 = sbr.rel (%p927) target = $region56
      $region55: #{tpu_custom_call.1} parent=5 // pred_region
        %s930 = ssub.s32 %s17, 2
        // Predicated region
        $region57: #{tpu_custom_call.1} parent=55 // pred_check
          %p931 = pneg %p135
        $region58: #{tpu_custom_call.1} parent=55 // pred_check_branch
          %933 = sbr.rel (%p931) target = $region60
        $region59: #{tpu_custom_call.1} parent=55 // pred_region
          %s934 = sand.u32 %s120, 1
          %s935 = scalar_lea.sflag [#allocation6], %s934
          %s936 = sand.u32 %s120, 1
          %s937 = smul.addr %s936, 8
          %s938 = scalar_lea.vmem [#allocation10], %s937
          %940 = dma.done %s935, 128
        $region60: #{tpu_custom_call.1} parent=55 // pred_fallthru
          _
      $region56: #{tpu_custom_call.1} parent=5 // pred_fallthru
        _
    $region6: #{tpu_custom_call.1} parent=1 // loop_footer
      %s21 = sadd.s32 1, %s17
    $region7: #{tpu_custom_call.1} parent=1 // loop_footer_branch
      %16 = sbr.rel target = $region3
    $region8: #{tpu_custom_call.1} parent=1 // loop_exit
      _
    %941 = vsyncpa [#allocation5], 1
    %s942 = scalar_lea.sflag [#allocation5], 1
    %943 = vsyncpa %s942, 1
    %944 = vsyncpa [#allocation8], 1
    %945 = vsyncpa [#allocation6], 1
    %s946 = scalar_lea.sflag [#allocation6], 1
    %947 = vsyncpa %s946, 1

</llo_original>
